<compile_context>
chip_gen: v7x
topology: tpu7x:2x2x1
jax: 0.10.0
libtpu: 0.0.40
codegen_flags: <defaults>
</compile_context>

<pallas_src>
import functools
import math

import jax
import jax.numpy as jnp
from jax.experimental import pallas as pl
from jax.experimental.pallas import tpu as pltpu

_LANES = 128  # TPU vreg lane width


def build_pe_table(d_model: int, max_seq_len: int = 151) -> jnp.ndarray:
    """Positional-encoding table matching the PyTorch __init__ loop exactly.

    pe[pos, 2k]   = sin(pos / 10000 ** (2 * (2k)     / d_model))
    pe[pos, 2k+1] = cos(pos / 10000 ** (2 * (2k + 1) / d_model))
    NOTE: the cos exponent 2*(i+1)/d_model is what the source module computes
    (it differs from the canonical Vaswani formula); we reproduce it on purpose.
    Returned shape: (1, max_seq_len, d_model), float32.
    """
    pos = jnp.arange(max_seq_len, dtype=jnp.float32)[:, None]          # (L, 1)
    i_even = jnp.arange(0, d_model, 2, dtype=jnp.float32)[None, :]      # (1, D/2)
    sin_part = jnp.sin(pos / jnp.power(10000.0, 2.0 * i_even / d_model))
    cos_part = jnp.cos(pos / jnp.power(10000.0, 2.0 * (i_even + 1.0) / d_model))
    pe = jnp.stack([sin_part, cos_part], axis=-1).reshape(max_seq_len, d_model)
    return pe[None, :, :].astype(jnp.float32)


def _pos_enc_kernel(x_ref, pe_ref, o_ref, *, scale):
    # x_ref / o_ref: (bt, R, 128) lane-dense tile covering bt batch rows.
    # pe_ref:        (1,  R, 128) shared PE tile (constant block index -> stays
    #                resident in VMEM); jnp broadcasting handles the batch dim.
    x = x_ref[...].astype(jnp.float32)
    pe = pe_ref[...].astype(jnp.float32)
    o_ref[...] = (x * scale + pe).astype(o_ref.dtype)


def positional_encoder(x: jnp.ndarray, pe_table: jnp.ndarray) -> jnp.ndarray:
    """x: (B, S, D); pe_table: (1, max_seq_len, D). Returns (B, S, D)."""
    B, S, D = x.shape
    max_seq_len = pe_table.shape[1]
    if S > max_seq_len:
        raise ValueError(f"seq_len {S} exceeds positional table length {max_seq_len}")

    scale = math.sqrt(D)  # sqrt(d_model), a Python float baked into the kernel
    pe = pe_table[:, :S, :].astype(x.dtype)  # glue slice/cast, plain JAX

    # ---- lane-dense view: flatten (S, D), pad to a multiple of 128 lanes ----
    L = S * D
    L_pad = pl.cdiv(L, _LANES) * _LANES
    x2 = x.reshape(B, L)
    pe2 = pe.reshape(1, L)
    if L_pad != L:
        x2 = jnp.pad(x2, ((0, 0), (0, L_pad - L)))
        pe2 = jnp.pad(pe2, ((0, 0), (0, L_pad - L)))
    R = L_pad // _LANES
    x3 = x2.reshape(B, R, _LANES)
    pe3 = pe2.reshape(1, R, _LANES)

    # ---- batch-tile size: biggest tile under a VMEM budget safe on all gens ----
    itemsize = jnp.dtype(x.dtype).itemsize
    row_bytes = R * _LANES * itemsize                       # one batch row, lane-dense
    target_block_bytes = 4 * 1024 * 1024                    # per x block
    # double-buffered x + out ~= 2*2*target = 16 MiB, fine for v7x (64 MiB) too
    bt = max(1, min(B, target_block_bytes // max(row_bytes, 1)))
    if B >= 2:
        # keep >= 2 grid steps so v7x's two TensorCores both get work
        bt = min(bt, (B + 1) // 2)
    while B % bt != 0:  # every block must be full
        bt -= 1
    grid = (B // bt,)

    kernel = functools.partial(_pos_enc_kernel, scale=scale)

    out3 = pl.pallas_call(
        kernel,
        out_shape=jax.ShapeDtypeStruct((B, R, _LANES), x.dtype),
        grid_spec=pltpu.PrefetchScalarGridSpec(
            num_scalar_prefetch=0,
            grid=grid,
            in_specs=[
                pl.BlockSpec((bt, R, _LANES), lambda b: (b, 0, 0)),  # x: bt rows/step
                pl.BlockSpec((1, R, _LANES), lambda b: (0, 0, 0)),   # pe: resident
            ],
            out_specs=pl.BlockSpec((bt, R, _LANES), lambda b: (b, 0, 0)),
        ),
        compiler_params=pltpu.CompilerParams(
            dimension_semantics=("parallel",),
            vmem_limit_bytes=32 * 1024 * 1024,
        ),
    )(x3, pe3)

    # ---- undo the lane-dense view (glue) ----
    out = out3.reshape(B, L_pad)
    if L_pad != L:
        out = out[:, :L]
    return out.reshape(B, S, D)


def positional_encoder_ref(x: jnp.ndarray, pe_table: jnp.ndarray) -> jnp.ndarray:
    """Pure-JAX reference mirroring the PyTorch forward."""
    S = x.shape[1]
    d_model = x.shape[-1]
    return x * math.sqrt(d_model) + pe_table[:, :S, :]


if __name__ == "__main__":
    B, S, D = 2, 8, 32          # batch, seq_len, d_model (seq <= max_seq_len=151)
    key = jax.random.PRNGKey(0)
    x = jax.random.normal(key, (B, S, D), dtype=jnp.float32)

    pe_table = build_pe_table(d_model=D, max_seq_len=151)

    out = jax.block_until_ready(positional_encoder(x, pe_table))

    ref = positional_encoder_ref(x, pe_table)
    assert out.shape == (B, S, D)
    assert jnp.allclose(out, ref, atol=1e-5, rtol=1e-5), "mismatch vs reference"

    print("KERNEL_OK")
</pallas_src>

<mosaic_0001>
module attributes {stable_mosaic.version = 11 : i64} {
  func.func @_pos_enc_kernel(%arg0: i32, %arg1: memref<1x2x128xf32, #tpu.memory_space<vmem>>, %arg2: memref<1x2x128xf32, #tpu.memory_space<vmem>>, %arg3: memref<1x2x128xf32, #tpu.memory_space<vmem>>) attributes {dimension_semantics = [#tpu.dimension_semantics<parallel>], iteration_bounds = array<i64: 2>, scalar_prefetch = 0 : i64, scratch_operands = 0 : i64, tpu.core_type = #tpu.core_type<tc>, window_params = [{transform_indices = @transform_0, window_bounds = array<i64: 1, 2, 128>}, {pipeline_mode = #tpu.pipeline_mode<synchronous>, transform_indices = @transform_1, window_bounds = array<i64: 1, 2, 128>}, {transform_indices = @transform_2, window_bounds = array<i64: 1, 2, 128>}]} {
    %c0 = arith.constant 0 : index
    %c0_0 = arith.constant 0 : index
    %c0_1 = arith.constant 0 : index
    %0 = vector.load %arg1[%c0, %c0_0, %c0_1] : memref<1x2x128xf32, #tpu.memory_space<vmem>>, vector<1x2x128xf32>
    %c0_2 = arith.constant 0 : index
    %c0_3 = arith.constant 0 : index
    %c0_4 = arith.constant 0 : index
    %1 = vector.load %arg2[%c0_2, %c0_3, %c0_4] : memref<1x2x128xf32, #tpu.memory_space<vmem>>, vector<1x2x128xf32>
    %cst = arith.constant 5.65685415 : f32
    %2 = vector.broadcast %cst : f32 to vector<1x2x128xf32>
    %3 = arith.mulf %0, %2 : vector<1x2x128xf32>
    %4 = arith.addf %3, %1 : vector<1x2x128xf32>
    %c0_5 = arith.constant 0 : index
    %c0_6 = arith.constant 0 : index
    %c0_7 = arith.constant 0 : index
    %5 = vector.load %arg3[%c0_5, %c0_6, %c0_7] : memref<1x2x128xf32, #tpu.memory_space<vmem>>, vector<1x2x128xf32>
    tpu.vector_store %arg3[%c0_5, %c0_6, %c0_7], %4 {strides = array<i32>} : memref<1x2x128xf32, #tpu.memory_space<vmem>>, vector<1x2x128xf32>,
    return
  }
  func.func @transform_0(%arg0: i32) -> (i32, i32, i32) {
    %c0_i32 = arith.constant 0 : i32
    %c0_i32_0 = arith.constant 0 : i32
    %c0_i32_1 = arith.constant 0 : i32
    return %arg0, %c0_i32, %c0_i32_0 : i32, i32, i32
  }
  func.func @transform_1(%arg0: i32) -> (i32, i32, i32) {
    %c0_i32 = arith.constant 0 : i32
    %c0_i32_0 = arith.constant 0 : i32
    %c0_i32_1 = arith.constant 0 : i32
    %c0_i32_2 = arith.constant 0 : i32
    return %c0_i32, %c0_i32_0, %c0_i32_1 : i32, i32, i32
  }
  func.func @transform_2(%arg0: i32) -> (i32, i32, i32) {
    %c0_i32 = arith.constant 0 : i32
    %c0_i32_0 = arith.constant 0 : i32
    %c0_i32_1 = arith.constant 0 : i32
    return %arg0, %c0_i32, %c0_i32_0 : i32, i32, i32
  }
}

</mosaic_0001>

<llo_original>
// kernel: tpu_custom_call.1
$region0: #{tpu_custom_call.1}
  #allocation0 [shape = 'u32[]', space=smem, size = 0x4, offset = 0x4, fixed_abs, tag = 'smem constant byte address 0x4 - core index']
  #allocation1 [shape = 'u32[144,128]{1,0:T(1,128)}', space=vmem, size = 0x12000, scoped, tag = 'internal scratch']
  %s0 = inlined_call_operand.hbm [shape: f32[2,2,128], index: 0, kind: input, shape index: {}]
  %s1 = inlined_call_operand.vmem [shape: f32[1,2,128], index: 1, kind: input, shape index: {}]
  %s2 = inlined_call_operand.hbm [shape: f32[2,2,128], index: 2, kind: output, shape index: {}]
  %s3 = sld [smem:[#allocation0]]
  $region45: #{tpu_custom_call.1} parent=0
    _
  %s5 = ssub.s32 1, %s3
  %s6 = scalar_select 0, %s5, %s3
  $region1: #{tpu_custom_call.1} parent=0
    #allocation2 [shape = 'u8[2048]{0}', space=vmem, size = 0x800, scoped, tag = 'input window, operand 0']
    #allocation3 [shape = 's32[2]{0}', space=sflag, size = 0x8, scoped, tag = 'scoped memory for tpu_custom_call.1']
    #allocation4 [shape = 's32[2]{0}', space=sflag, size = 0x8, scoped, tag = 'scoped memory for tpu_custom_call.1']
    #allocation5 [shape = 'u8[2048]{0}', space=vmem, size = 0x800, scoped, tag = 'output window, operand 0']
    %7 = vsyncpa [#allocation3], 0
    %s8 = scalar_lea.sflag [#allocation3], 1
    %9 = vsyncpa %s8, 0
    %10 = vsyncpa [#allocation4], 0
    %s11 = scalar_lea.sflag [#allocation4], 1
    %12 = vsyncpa %s11, 0
    loop: start=0, step=1, limit=4
    $region2: #{tpu_custom_call.1} parent=1 // loop_pre_header
      _
    $region3: #{tpu_custom_call.1} parent=1 // loop_header
      %s14 = sphi 0, %s18
      %p15 = scmp.ge.s32.totalorder %s14, 4
      %s24 = sphi 0, %s26
      %s27 = sphi 0, %s24
      %s28 = sphi 0, %s27
      %s44 = sphi 0, %s28
      %s48 = sphi 0, %s48
      %s50 = sphi 0, %s48
      %s51 = sphi 0, %s50
      %s65 = sphi 0, %s51
      %s71 = sphi 0, %s73
      %s74 = sphi 0, %s71
      %s75 = sphi 0, %s74
      %s91 = sphi 0, %s75
    $region4: #{tpu_custom_call.1} parent=1 // loop_header_branch
      %17 = sbr.rel (%p15) target = $region8
    $region5: #{tpu_custom_call.1} parent=1 // loop_body
      %s19 = ssub.s32 %s14, 1
      %s20 = ssub.s32 %s14, 2
      %s21 = sadd.s32 %s14, 1
      %s22 = ssub.s32 %s14, %s21
      %p23 = scmp.eq.s32.totalorder %s22, 0
      %s25 = sadd.s32 %s24, 1
      %s26 = scalar_select %p23, %s24, %s25
      %p29 = pneg %p23
      %p30 = scmp.eq.s32.totalorder %s14, 1
      %p31 = por %p29, %p30
      %p32 = scmp.ne.s32.totalorder %s24, %s27
      %p33 = scmp.eq.s32.totalorder %s14, 0
      %p34 = por %p32, %p33
      %p35 = scmp.ne.s32.totalorder %s24, %s27
      %p36 = scmp.eq.s32.totalorder %s19, 1
      %p37 = por %p35, %p36
      %p38 = scmp.ne.s32.totalorder %s27, %s28
      %p39 = scmp.eq.s32.totalorder %s19, 0
      %p40 = por %p38, %p39
      %p41 = scmp.ne.s32.totalorder %s27, %s28
      %p42 = scmp.eq.s32.totalorder %s20, 1
      %p43 = por %p41, %p42
      %p45 = scmp.ne.s32.totalorder %s28, %s44
      %p46 = scmp.eq.s32.totalorder %s20, 0
      %p47 = por %p45, %p46
      %s49 = sadd.s32 %s48, 1
      %p52 = scmp.eq.s32.totalorder %s14, 1
      %p53 = scmp.ne.s32.totalorder %s48, %s50
      %p54 = scmp.eq.s32.totalorder %s14, 0
      %p55 = por %p53, %p54
      %p56 = scmp.ne.s32.totalorder %s48, %s50
      %p57 = scmp.eq.s32.totalorder %s19, 1
      %p58 = por %p56, %p57
      %p59 = scmp.ne.s32.totalorder %s50, %s51
      %p60 = scmp.eq.s32.totalorder %s19, 0
      %p61 = por %p59, %p60
      %p62 = scmp.ne.s32.totalorder %s50, %s51
      %p63 = scmp.eq.s32.totalorder %s20, 1
      %p64 = por %p62, %p63
      %p66 = scmp.ne.s32.totalorder %s51, %s65
      %p67 = scmp.eq.s32.totalorder %s20, 0
      %p68 = por %p66, %p67
      %s69 = ssub.s32 %s14, %s21
      %p70 = scmp.eq.s32.totalorder %s69, 0
      %s72 = sadd.s32 %s71, 1
      %s73 = scalar_select %p70, %s71, %s72
      %p76 = pneg %p70
      %p77 = scmp.eq.s32.totalorder %s14, 1
      %p78 = por %p76, %p77
      %p79 = scmp.ne.s32.totalorder %s71, %s74
      %p80 = scmp.eq.s32.totalorder %s14, 0
      %p81 = por %p79, %p80
      %p82 = scmp.ne.s32.totalorder %s71, %s74
      %p83 = scmp.eq.s32.totalorder %s19, 1
      %p84 = por %p82, %p83
      %p85 = scmp.ne.s32.totalorder %s74, %s75
      %p86 = scmp.eq.s32.totalorder %s19, 0
      %p87 = por %p85, %p86
      %p88 = scmp.ne.s32.totalorder %s74, %s75
      %p89 = scmp.eq.s32.totalorder %s20, 1
      %p90 = por %p88, %p89
      %p92 = scmp.ne.s32.totalorder %s75, %s91
      %p93 = scmp.eq.s32.totalorder %s20, 0
      %p94 = por %p92, %p93
      %p95 = scmp.le.s32.totalorder 1, %s14
      %p96 = scmp.lt.s32.totalorder %s14, 3
      %p97 = pnand %p95, %p96
      %p98 = pneg %p97
      // Predicated region
      $region9: #{tpu_custom_call.1} parent=5 // pred_check
        _
      $region10: #{tpu_custom_call.1} parent=5 // pred_check_branch
        %100 = sbr.rel (%p97) target = $region12
      $region11: #{tpu_custom_call.1} parent=5 // pred_region
        %s101 = ssub.s32 %s14, 1
        // Predicated region
        $region13: #{tpu_custom_call.1} parent=11 // pred_check
          %p102 = pneg %p61
        $region14: #{tpu_custom_call.1} parent=11 // pred_check_branch
          %104 = sbr.rel (%p102) target = $region16
        $region15: #{tpu_custom_call.1} parent=11 // pred_region
          _
        $region16: #{tpu_custom_call.1} parent=11 // pred_fallthru
          _
      $region12: #{tpu_custom_call.1} parent=5 // pred_fallthru
        _
      %p105 = scmp.lt.s32.totalorder %s14, 2
      // Predicated region
      $region17: #{tpu_custom_call.1} parent=5 // pred_check
        %p106 = pneg %p105
      $region18: #{tpu_custom_call.1} parent=5 // pred_check_branch
        %108 = sbr.rel (%p106) target = $region20
      $region19: #{tpu_custom_call.1} parent=5 // pred_region
        // Predicated region
        $region21: #{tpu_custom_call.1} parent=19 // pred_check
          %p109 = pneg %p34
        $region22: #{tpu_custom_call.1} parent=19 // pred_check_branch
          %111 = sbr.rel (%p109) target = $region24
        $region23: #{tpu_custom_call.1} parent=19 // pred_region
          %s112 = sand.u32 %s24, 1
          %s113 = scalar_lea.sflag [#allocation3], %s112
          %s114 = sand.u32 %s24, 1
          %s115 = smul.addr %s114, 2
          %s116 = scalar_lea.vmem [#allocation2], %s115
          %s118 = ssub.s32 32, 32
          %119 = vsyncadd %s113, %s118
          %s120 = smul.addr %s14, 32
          %s121 = scalar_lea.hbm %s0, %s120
          %s123 = sshll.u32 %s116, 4
          %s124 = int_to_ptr.vmem [resolvable:$true] %s123
          %126 = dma.hbm_to_vmem [thread:$0]  %s121, 32, %s124, %s113
        $region24: #{tpu_custom_call.1} parent=19 // pred_fallthru
          _
      $region20: #{tpu_custom_call.1} parent=5 // pred_fallthru
        _
      %p127 = scmp.le.s32.totalorder 1, %s14
      %p128 = scmp.lt.s32.totalorder %s14, 3
      %p129 = pnand %p127, %p128
      %p130 = pneg %p129
      // Predicated region
      $region25: #{tpu_custom_call.1} parent=5 // pred_check
        _
      $region26: #{tpu_custom_call.1} parent=5 // pred_check_branch
        %132 = sbr.rel (%p129) target = $region28
      $region27: #{tpu_custom_call.1} parent=5 // pred_region
        %s133 = ssub.s32 %s14, 1
        %s134 = sand.u32 %s27, 1
        %s135 = scalar_lea.sflag [#allocation3], %s134
        %s136 = sand.u32 %s27, 1
        %s137 = smul.addr %s136, 2
        %s138 = scalar_lea.vmem [#allocation2], %s137
        // Predicated region
        $region29: #{tpu_custom_call.1} parent=27 // pred_check
          %p139 = pneg %p40
        $region30: #{tpu_custom_call.1} parent=27 // pred_check_branch
          %141 = sbr.rel (%p139) target = $region32
        $region31: #{tpu_custom_call.1} parent=27 // pred_region
          %142 = dma.done %s135, 32
        $region32: #{tpu_custom_call.1} parent=27 // pred_fallthru
          _
        %s143 = sand.u32 %s27, 1
        %s144 = scalar_lea.sflag [#allocation3], %s143
        %s145 = sand.u32 %s27, 1
        %s146 = smul.addr %s145, 2
        %s147 = scalar_lea.vmem [#allocation2], %s146
        %p148 = pneg %p40
        %p149 = pneg %p37
        %p150 = pneg %p61
        %p151 = pneg %p58
        %p152 = pneg %p87
        %p153 = pneg %p84
        %s154 = sand.u32 %s74, 1
        %s155 = scalar_lea.sflag [#allocation4], %s154
        %s156 = sand.u32 %s74, 1
        %s157 = smul.addr %s156, 2
        %s158 = scalar_lea.vmem [#allocation5], %s157
        %v159 = vld [vmem:[%s138] sm:$0x3]
        %v160 = vld [vmem:[%s1] sm:$0x3]
        %v161 = vmul.f32 %v159, 5.656854
        %v162 = vadd.f32 %v161, %v160
        %163 = vst [vmem:[%s158] sm:$0x3] %v162
        %s164 = sand.u32 %s74, 1
        %s165 = scalar_lea.sflag [#allocation4], %s164
        %s166 = sand.u32 %s74, 1
        %s167 = smul.addr %s166, 2
        %s168 = scalar_lea.vmem [#allocation5], %s167
        // Predicated region
        $region33: #{tpu_custom_call.1} parent=27 // pred_check
          %p169 = pneg %p84
        $region34: #{tpu_custom_call.1} parent=27 // pred_check_branch
          %171 = sbr.rel (%p169) target = $region36
        $region35: #{tpu_custom_call.1} parent=27 // pred_region
          %s173 = ssub.s32 32, 32
          %174 = vsyncadd %s165, %s173
          %s175 = smul.addr %s19, 32
          %s176 = scalar_lea.hbm %s2, %s175
          %s178 = sshll.u32 %s168, 4
          %s179 = int_to_ptr.vmem [resolvable:$true] %s178
          %181 = dma.vmem_to_hbm [thread:$0]  %s179, 32, %s176, %s165
        $region36: #{tpu_custom_call.1} parent=27 // pred_fallthru
          _
      $region28: #{tpu_custom_call.1} parent=5 // pred_fallthru
        _
      %p182 = scmp.le.s32.totalorder 2, %s14
      // Predicated region
      $region37: #{tpu_custom_call.1} parent=5 // pred_check
        %p183 = pneg %p182
      $region38: #{tpu_custom_call.1} parent=5 // pred_check_branch
        %185 = sbr.rel (%p183) target = $region40
      $region39: #{tpu_custom_call.1} parent=5 // pred_region
        %s186 = ssub.s32 %s14, 2
        // Predicated region
        $region41: #{tpu_custom_call.1} parent=39 // pred_check
          %p187 = pneg %p90
        $region42: #{tpu_custom_call.1} parent=39 // pred_check_branch
          %189 = sbr.rel (%p187) target = $region44
        $region43: #{tpu_custom_call.1} parent=39 // pred_region
          %s190 = sand.u32 %s75, 1
          %s191 = scalar_lea.sflag [#allocation4], %s190
          %s192 = sand.u32 %s75, 1
          %s193 = smul.addr %s192, 2
          %s194 = scalar_lea.vmem [#allocation5], %s193
          %195 = dma.done %s191, 32
        $region44: #{tpu_custom_call.1} parent=39 // pred_fallthru
          _
      $region40: #{tpu_custom_call.1} parent=5 // pred_fallthru
        _
    $region6: #{tpu_custom_call.1} parent=1 // loop_footer
      %s18 = sadd.s32 1, %s14
    $region7: #{tpu_custom_call.1} parent=1 // loop_footer_branch
      %13 = sbr.rel target = $region3
    $region8: #{tpu_custom_call.1} parent=1 // loop_exit
      _
    %196 = vsyncpa [#allocation3], 1
    %s197 = scalar_lea.sflag [#allocation3], 1
    %198 = vsyncpa %s197, 1
    %199 = vsyncpa [#allocation4], 1
    %s200 = scalar_lea.sflag [#allocation4], 1
    %201 = vsyncpa %s200, 1

</llo_original>
